<compile_context>
chip_gen: v7x
topology: tpu7x:2x2x1
jax: 0.10.0
libtpu: 0.0.40
codegen_flags: <defaults>
</compile_context>

<pallas_src>
import jax
import jax.numpy as jnp
from jax import lax
from jax.experimental import pallas as pl
from jax.experimental.pallas import tpu as pltpu

# ----- model hyper-parameters (small, forward-consistent shapes) -----
B = 8                 # batch
CONTEXT_LEN = 64      # context_length
PRED_LEN = 8          # prediction_length
HIDDEN = [32, 32]     # hidden_dimensions
MIN_SCALE = 1e-5      # mean_abs_scaling min_scale

OUT_W = 128           # lane-dense packed output width (one full vreg lane row)
S_COL = 3 * PRED_LEN  # column holding the per-row scale s

# dimensions = [context_length] + hidden_dimensions[:-1]  -> [64, 32]
# nn = Linear(64 -> 32), ReLU, Linear(32 -> PRED_LEN * 32)
# args_proj = 3 x Linear(32 -> 1) + StudentT domain map


# ---------------- fused Pallas kernel ----------------

def fused_ffn_kernel(x_ref, w1_ref, b1_ref, wh_ref, bh_ref, out_ref):
    """scaling + Linear + ReLU + fused (Linear . args_proj) + domain map.

    x: (B, C) -> packed out: (B, 128)
      cols [0:P)   df   = 2 + softplus(raw)
      cols [P:2P)  loc  = raw
      cols [2P:3P) scale= softplus(raw)
      col  3P      s    (mean-abs scale)
      rest zero.
    """
    x = x_ref[...]                                                     # (B, C)

    # Push the first matmul to the MXU right away; the mean-|x| reduce (XLU)
    # and clamp overlap with it instead of serializing the kernel head.
    h_raw = jnp.dot(x, w1_ref[...], preferred_element_type=jnp.float32)   # (B, H0)

    # mean_abs_scaling: clamp(mean(|x|, axis=1), 1e-5).unsqueeze(1)
    s = jnp.maximum(jnp.mean(jnp.abs(x), axis=-1, keepdims=True), MIN_SCALE)  # (B,1)

    # (x / s) @ W1 == (x @ W1) / s for a per-row scalar; exact division kept
    # (s itself is checked at 1e-6 and the heads at 1e-4).
    h = jnp.maximum(h_raw / s + b1_ref[...], 0.0)                      # (B, H0)

    # ONE fused head matmul: (B, H0) @ (H0, 128) -> (B, 128)
    head = jnp.dot(h, wh_ref[...], preferred_element_type=jnp.float32) + bh_ref[...]

    # StudentT domain map on the packed slab (one vreg of EUP/VPU work).
    sp = jnp.logaddexp(head, 0.0)                                      # softplus
    col = lax.broadcasted_iota(jnp.int32, head.shape, 1)
    s_b = jnp.broadcast_to(s, head.shape)
    out = jnp.where(col < PRED_LEN, sp + 2.0,
          jnp.where(col < 2 * PRED_LEN, head,
          jnp.where(col < 3 * PRED_LEN, sp,
          jnp.where(col == S_COL, s_b, 0.0))))
    out_ref[...] = out                                                 # one unmasked (B,128) store


# ---------------- wrapper ----------------

_VMEM = pl.BlockSpec(memory_space=pltpu.MemorySpace.VMEM)


def fold_params(params, batch=B):
    """Host-side algebraic fold of (w2, b2) with (wp, bp) into one padded head.

    raw[b,p,k] = h[b,:] @ W_k[:,p] + b_k[p], where
      W_k[h0,p] = sum_h w2[h0, p*H + h] * wp[h, k]
      b_k[p]    = sum_h b2[p*H + h] * wp[h, k] + bp[k]
    Packed column layout: k*P + p for k in (df, loc, scale); zero-padded to 128.
    """
    w1, b1, w2, b2, wp, bp = params
    h0, hlast = HIDDEN[0], HIDDEN[-1]

    wf = jnp.einsum('aph,hk->apk', w2.reshape(h0, PRED_LEN, hlast), wp)   # (H0, P, 3)
    bf = b2.reshape(PRED_LEN, hlast) @ wp + bp.reshape(1, 3)              # (P, 3)

    w_core = jnp.transpose(wf, (0, 2, 1)).reshape(h0, 3 * PRED_LEN)       # col = k*P + p
    b_core = bf.T.reshape(1, 3 * PRED_LEN)

    w_head = jnp.zeros((h0, OUT_W), jnp.float32).at[:, :3 * PRED_LEN].set(w_core)
    b_head = jnp.zeros((1, OUT_W), jnp.float32).at[:, :3 * PRED_LEN].set(b_core)

    # Pre-broadcast biases to B rows: plain vreg adds in-kernel.
    b1_b = jnp.broadcast_to(b1.reshape(1, h0), (batch, h0))
    b_head_b = jnp.broadcast_to(b_head, (batch, OUT_W))
    return (w1, b1_b, w_head, b_head_b)


def simple_feedforward_forward(past_target, fused_params):
    """Returns (distr_args, loc, scale) exactly as the torch forward does."""
    w1, b1_b, w_head, b_head_b = fused_params
    b_ = past_target.shape[0]

    cost = pl.CostEstimate(
        flops=2 * b_ * CONTEXT_LEN * HIDDEN[0] + 2 * b_ * HIDDEN[0] * OUT_W,
        transcendentals=2 * b_ * OUT_W,
        bytes_accessed=4 * (b_ * CONTEXT_LEN
                            + CONTEXT_LEN * HIDDEN[0] + b_ * HIDDEN[0]
                            + HIDDEN[0] * OUT_W + b_ * OUT_W
                            + b_ * OUT_W),
    )

    packed = pl.pallas_call(
        fused_ffn_kernel,
        out_shape=jax.ShapeDtypeStruct((b_, OUT_W), jnp.float32),
        in_specs=[_VMEM] * 5,
        out_specs=_VMEM,
        cost_estimate=cost,
    )(past_target, w1, b1_b, w_head, b_head_b)

    df = packed[:, 0:PRED_LEN]
    loc_a = packed[:, PRED_LEN:2 * PRED_LEN]
    scale_a = packed[:, 2 * PRED_LEN:3 * PRED_LEN]
    s = packed[:, S_COL:S_COL + 1]

    distr_args = (df, loc_a, scale_a)                                  # each (B, P)
    loc = jnp.zeros((b_, 1), jnp.float32)
    return distr_args, loc, s


# ---------------- deterministic parameter init ----------------

def _xavier_uniform(key, fan_in, fan_out):
    a = (6.0 / (fan_in + fan_out)) ** 0.5
    return jax.random.uniform(key, (fan_in, fan_out), jnp.float32, -a, a)


def init_params(key):
    k1, k2, k3 = jax.random.split(key, 3)
    w1 = _xavier_uniform(k1, CONTEXT_LEN, HIDDEN[0])                 # Linear(C -> H0)
    b1 = jnp.zeros((1, HIDDEN[0]), jnp.float32)
    w2 = _xavier_uniform(k2, HIDDEN[0], PRED_LEN * HIDDEN[-1])       # Linear(H0 -> P*H)
    b2 = jnp.zeros((1, PRED_LEN * HIDDEN[-1]), jnp.float32)
    # args_proj: three Linear(H, 1) heads packed as one (H, 3) weight
    wp = jax.random.uniform(k3, (HIDDEN[-1], 3), jnp.float32, -0.07, 0.07)
    bp = jnp.zeros((1, 3), jnp.float32)
    return (w1, b1, w2, b2, wp, bp)


# ---------------- pure-JAX reference (unfused) for sanity check ----------------

def reference_forward(past_target, params):
    w1, b1, w2, b2, wp, bp = params
    s = jnp.maximum(jnp.mean(jnp.abs(past_target), axis=1, keepdims=True), MIN_SCALE)
    h = jnp.maximum(past_target / s @ w1 + b1, 0.0)
    nn_out = h @ w2 + b2
    feats = nn_out.reshape(-1, HIDDEN[-1])
    raw = feats @ wp + bp
    df = (2.0 + jax.nn.softplus(raw[:, 0])).reshape(past_target.shape[0], PRED_LEN)
    loc_a = raw[:, 1].reshape(past_target.shape[0], PRED_LEN)
    scale_a = jax.nn.softplus(raw[:, 2]).reshape(past_target.shape[0], PRED_LEN)
    return (df, loc_a, scale_a), jnp.zeros((past_target.shape[0], 1), jnp.float32), s


# TODO(synk): only scale='mean' (mean_abs_scaling) implemented; 'mean-demand'
# (nanmean-based), scale=None, and batch_norm=True modes of the original module
# are not covered.

if __name__ == "__main__":
    key = jax.random.PRNGKey(0)
    pkey, xkey = jax.random.split(key)
    params = init_params(pkey)
    fused_params = jax.tree_util.tree_map(
        jax.block_until_ready, fold_params(params, batch=B))
    past_target = jax.random.normal(xkey, (B, CONTEXT_LEN), jnp.float32)

    (df, loc_a, scale_a), loc, s = jax.block_until_ready(
        simple_feedforward_forward(past_target, fused_params)
    )

    # sanity check against pure-JAX (unfused) reference
    (rdf, rloc_a, rscale_a), rloc, rs = reference_forward(past_target, params)
    assert df.shape == (B, PRED_LEN) and loc.shape == (B, 1) and s.shape == (B, 1)
    assert jnp.allclose(df, rdf, atol=1e-4, rtol=1e-4)
    assert jnp.allclose(loc_a, rloc_a, atol=1e-4, rtol=1e-4)
    assert jnp.allclose(scale_a, rscale_a, atol=1e-4, rtol=1e-4)
    assert jnp.allclose(s, rs, atol=1e-6)
    assert jnp.allclose(loc, rloc)

    print("KERNEL_OK")
</pallas_src>

<mosaic_0001>
module attributes {stable_mosaic.version = 11 : i64} {
  func.func @fused_ffn_kernel(%arg0: memref<8x64xf32, #tpu.memory_space<vmem>>, %arg1: memref<64x32xf32, #tpu.memory_space<vmem>>, %arg2: memref<8x32xf32, #tpu.memory_space<vmem>>, %arg3: memref<32x128xf32, #tpu.memory_space<vmem>>, %arg4: memref<8x128xf32, #tpu.memory_space<vmem>>, %arg5: memref<8x128xf32, #tpu.memory_space<vmem>>) attributes {dimension_semantics = [], scalar_prefetch = 0 : i64, scratch_operands = 0 : i64, tpu.core_type = #tpu.core_type<tc>} {
    %c0 = arith.constant 0 : index
    %c0_0 = arith.constant 0 : index
    %0 = vector.load %arg0[%c0, %c0_0] : memref<8x64xf32, #tpu.memory_space<vmem>>, vector<8x64xf32>
    %c0_1 = arith.constant 0 : index
    %c0_2 = arith.constant 0 : index
    %1 = vector.load %arg1[%c0_1, %c0_2] : memref<64x32xf32, #tpu.memory_space<vmem>>, vector<64x32xf32>
    %cst = arith.constant dense<0.000000e+00> : vector<8x32xf32>
    %2 = tpu.matmul %0, %1, %cst {dimension_numbers = #tpu.dot_dimension_numbers<[1], [0], [0], [1], [0, 0, 1, 1], [], []>} : vector<8x64xf32>, vector<64x32xf32>, vector<8x32xf32> -> vector<8x32xf32>
    %3 = math.absf %0 : vector<8x64xf32>
    %cst_3 = arith.constant dense<0.000000e+00> : vector<8xf32>
    %4 = vector.multi_reduction <add>, %3, %cst_3 [1] : vector<8x64xf32> to vector<8xf32>
    %5 = vector.shape_cast %4 : vector<8xf32> to vector<8x1xf32>
    %cst_4 = arith.constant 6.400000e+01 : f32
    %6 = vector.broadcast %cst_4 : f32 to vector<8x1xf32>
    %7 = arith.divf %5, %6 : vector<8x1xf32>
    %cst_5 = arith.constant 9.99999974E-6 : f32
    %8 = vector.broadcast %cst_5 : f32 to vector<8x1xf32>
    %9 = arith.maximumf %7, %8 : vector<8x1xf32>
    %10 = vector.broadcast %9 : vector<8x1xf32> to vector<8x32xf32>
    %11 = arith.divf %2, %10 : vector<8x32xf32>
    %c0_6 = arith.constant 0 : index
    %c0_7 = arith.constant 0 : index
    %12 = vector.load %arg2[%c0_6, %c0_7] : memref<8x32xf32, #tpu.memory_space<vmem>>, vector<8x32xf32>
    %13 = arith.addf %11, %12 : vector<8x32xf32>
    %cst_8 = arith.constant 0.000000e+00 : f32
    %14 = vector.broadcast %cst_8 : f32 to vector<8x32xf32>
    %15 = arith.maximumf %13, %14 : vector<8x32xf32>
    %c0_9 = arith.constant 0 : index
    %c0_10 = arith.constant 0 : index
    %16 = vector.load %arg3[%c0_9, %c0_10] : memref<32x128xf32, #tpu.memory_space<vmem>>, vector<32x128xf32>
    %cst_11 = arith.constant dense<0.000000e+00> : vector<8x128xf32>
    %17 = tpu.matmul %15, %16, %cst_11 {dimension_numbers = #tpu.dot_dimension_numbers<[1], [0], [0], [1], [0, 0, 1, 1], [], []>} : vector<8x32xf32>, vector<32x128xf32>, vector<8x128xf32> -> vector<8x128xf32>
    %c0_12 = arith.constant 0 : index
    %c0_13 = arith.constant 0 : index
    %18 = vector.load %arg4[%c0_12, %c0_13] : memref<8x128xf32, #tpu.memory_space<vmem>>, vector<8x128xf32>
    %19 = arith.addf %17, %18 : vector<8x128xf32>
    %cst_14 = arith.constant 0.000000e+00 : f32
    %20 = vector.broadcast %cst_14 : f32 to vector<8x128xf32>
    %21 = arith.maximumf %19, %20 : vector<8x128xf32>
    %22 = vector.broadcast %cst_14 : f32 to vector<8x128xf32>
    %23 = arith.subf %19, %22 : vector<8x128xf32>
    %24 = arith.cmpf one, %23, %23 : vector<8x128xf32>
    %25 = vector.broadcast %cst_14 : f32 to vector<8x128xf32>
    %26 = arith.addf %19, %25 : vector<8x128xf32>
    %27 = math.absf %23 : vector<8x128xf32>
    %cst_15 = arith.constant 0.000000e+00 : f32
    %28 = vector.broadcast %cst_15 : f32 to vector<8x128xf32>
    %29 = arith.subf %28, %27 : vector<8x128xf32>
    %30 = math.exp %29 : vector<8x128xf32>
    %31 = math.log1p %30 : vector<8x128xf32>
    %32 = arith.addf %21, %31 : vector<8x128xf32>
    %33 = arith.select %24, %26, %32 : vector<8x128xi1>, vector<8x128xf32>
    %34 = tpu.iota {dimensions = array<i32: 1>} : vector<8x128xi32>
    %35 = vector.shape_cast %9 : vector<8x1xf32> to vector<8x1xf32>
    %36 = vector.broadcast %35 : vector<8x1xf32> to vector<8x128xf32>
    %c8_i32 = arith.constant 8 : i32
    %37 = vector.broadcast %c8_i32 : i32 to vector<8x128xi32>
    %38 = arith.cmpi slt, %34, %37 : vector<8x128xi32>
    %cst_16 = arith.constant 2.000000e+00 : f32
    %39 = vector.broadcast %cst_16 : f32 to vector<8x128xf32>
    %40 = arith.addf %33, %39 : vector<8x128xf32>
    %c16_i32 = arith.constant 16 : i32
    %41 = vector.broadcast %c16_i32 : i32 to vector<8x128xi32>
    %42 = arith.cmpi slt, %34, %41 : vector<8x128xi32>
    %c24_i32 = arith.constant 24 : i32
    %43 = vector.broadcast %c24_i32 : i32 to vector<8x128xi32>
    %44 = arith.cmpi slt, %34, %43 : vector<8x128xi32>
    %c24_i32_17 = arith.constant 24 : i32
    %45 = vector.broadcast %c24_i32_17 : i32 to vector<8x128xi32>
    %46 = arith.cmpi eq, %34, %45 : vector<8x128xi32>
    %cst_18 = arith.constant 0.000000e+00 : f32
    %47 = vector.broadcast %cst_18 : f32 to vector<8x128xf32>
    %48 = arith.select %46, %36, %47 : vector<8x128xi1>, vector<8x128xf32>
    %49 = arith.select %44, %33, %48 : vector<8x128xi1>, vector<8x128xf32>
    %50 = arith.select %42, %19, %49 : vector<8x128xi1>, vector<8x128xf32>
    %51 = arith.select %38, %40, %50 : vector<8x128xi1>, vector<8x128xf32>
    %c0_19 = arith.constant 0 : index
    %c0_20 = arith.constant 0 : index
    %52 = vector.load %arg5[%c0_19, %c0_20] : memref<8x128xf32, #tpu.memory_space<vmem>>, vector<8x128xf32>
    tpu.vector_store %arg5[%c0_19, %c0_20], %51 {strides = array<i32>} : memref<8x128xf32, #tpu.memory_space<vmem>>, vector<8x128xf32>,
    return
  }
}

</mosaic_0001>

<llo_original>
// kernel: tpu_custom_call.1
$region0: #{tpu_custom_call.1}
  #allocation0 [shape = 'u32[]', space=smem, size = 0x4, offset = 0x4, fixed_abs, tag = 'smem constant byte address 0x4 - core index']
  #allocation1 [shape = 'u32[144,128]{1,0:T(1,128)}', space=vmem, size = 0x12000, scoped, tag = 'internal scratch']
  %s0 = inlined_call_operand.vmem [shape: f32[8,64], index: 0, kind: input, shape index: {}]
  %s1 = inlined_call_operand.vmem [shape: f32[64,32], index: 1, kind: input, shape index: {}]
  %s2 = inlined_call_operand.vmem [shape: f32[8,32], index: 2, kind: input, shape index: {}]
  %s3 = inlined_call_operand.vmem [shape: f32[32,128], index: 3, kind: input, shape index: {}]
  %s4 = inlined_call_operand.vmem [shape: f32[8,128], index: 4, kind: input, shape index: {}]
  %s5 = inlined_call_operand.hbm [shape: f32[8,128], index: 5, kind: output, shape index: {}]
  %s6 = sld [smem:[#allocation0]]
  $region30: #{tpu_custom_call.1} parent=0
    _
  %s8 = ssub.s32 1, %s6
  %s9 = scalar_select 0, %s8, %s6
  $region1: #{tpu_custom_call.1} parent=0
    #allocation2 [shape = 'u8[4096]{0}', space=vmem, size = 0x1000, scoped, tag = 'output window, operand 0, single buffered']
    #allocation3 [shape = 's32[1]{0}', space=sflag, size = 0x4, scoped, tag = 'scoped memory for tpu_custom_call.1']
    %10 = vsyncpa [#allocation3], 0
    // Predicated region
    $region2: #{tpu_custom_call.1} parent=1 // pred_check
      _
    $region3: #{tpu_custom_call.1} parent=1 // pred_check_branch
      %12 = sbr.rel (0) target = $region5
    $region4: #{tpu_custom_call.1} parent=1 // pred_region
      _
    $region5: #{tpu_custom_call.1} parent=1 // pred_fallthru
      _
    // Predicated region
    $region6: #{tpu_custom_call.1} parent=1 // pred_check
      _
    $region7: #{tpu_custom_call.1} parent=1 // pred_check_branch
      %14 = sbr.rel (0) target = $region9
    $region8: #{tpu_custom_call.1} parent=1 // pred_region
      _
    $region9: #{tpu_custom_call.1} parent=1 // pred_fallthru
      _
    // Predicated region
    $region10: #{tpu_custom_call.1} parent=1 // pred_check
      _
    $region11: #{tpu_custom_call.1} parent=1 // pred_check_branch
      %16 = sbr.rel (0) target = $region13
    $region12: #{tpu_custom_call.1} parent=1 // pred_region
      _
    $region13: #{tpu_custom_call.1} parent=1 // pred_fallthru
      _
    // Predicated region
    $region14: #{tpu_custom_call.1} parent=1 // pred_check
      _
    $region15: #{tpu_custom_call.1} parent=1 // pred_check_branch
      %18 = sbr.rel (0) target = $region17
    $region16: #{tpu_custom_call.1} parent=1 // pred_region
      _
    $region17: #{tpu_custom_call.1} parent=1 // pred_fallthru
      _
    // Predicated region
    $region18: #{tpu_custom_call.1} parent=1 // pred_check
      _
    $region19: #{tpu_custom_call.1} parent=1 // pred_check_branch
      %20 = sbr.rel (0) target = $region21
    $region20: #{tpu_custom_call.1} parent=1 // pred_region
      _
    $region21: #{tpu_custom_call.1} parent=1 // pred_fallthru
      _
    %v21 = vld [vmem:[%s0] sm:$0xff]
    %v22 = vld [vmem:[%s1] sm:$0xff]
    %v23 = vld [vmem:[%s1 + $0x8] sm:$0xff]
    %v24 = vld [vmem:[%s1 + $0x10] sm:$0xff]
    %v25 = vld [vmem:[%s1 + $0x18] sm:$0xff]
    %v26 = vld [vmem:[%s1 + $0x20] sm:$0xff]
    %v27 = vld [vmem:[%s1 + $0x28] sm:$0xff]
    %v28 = vld [vmem:[%s1 + $0x30] sm:$0xff]
    %v29 = vld [vmem:[%s1 + $0x38] sm:$0xff]
    %vm30 = vcmask 523264
    %v32 = vsel %vm30, %v21, 0
    %34 = vmatprep.subr.mxu0 0.0
    %35 = vmatpush1.msra.mxu0 %v22
    %36 = vmatprep.subr.mxu0 0.0
    %37 = vmatpush1.msra.mxu0 %v23
    %38 = vmatprep.subr.mxu0 0.0
    %39 = vmatpush1.msra.mxu0 %v24
    %40 = vmatprep.subr.mxu0 0.0
    %41 = vmatpush1.msra.mxu0 %v25
    %42 = vmatprep.subr.mxu0 0.0
    %43 = vmatpush1.msra.mxu0 %v26
    %44 = vmatprep.subr.mxu0 0.0
    %45 = vmatpush1.msra.mxu0 %v27
    %46 = vmatprep.subr.mxu0 0.0
    %47 = vmatpush1.msra.mxu0 %v28
    %48 = vmatprep.subr.mxu0 0.0
    %49 = vmatpush1.msra.mxu0 %v29
    %50 = vmatprep.subr.mxu0 0.0
    %51 = vmatpush1.msra.mxu0 0.0
    %52 = vmatprep.subr.mxu0 0.0
    %53 = vmatpush1.msra.mxu0 0.0
    %54 = vmatprep.subr.mxu0 0.0
    %55 = vmatpush1.msra.mxu0 0.0
    %56 = vmatprep.subr.mxu0 0.0
    %57 = vmatpush1.msra.mxu0 0.0
    %58 = vmatprep.subr.mxu0 0.0
    %59 = vmatpush1.msra.mxu0 0.0
    %60 = vmatprep.subr.mxu0 0.0
    %61 = vmatpush1.msra.mxu0 0.0
    %62 = vmatprep.subr.mxu0 0.0
    %63 = vmatpush1.msra.mxu0 0.0
    %64 = vmatprep.subr.mxu0 0.0
    %65 = vmatpush1.msra.mxu0 0.0
    %66 = vmatprep.subr.mxu0 0.0
    %67 = vmatpush1.msra.mxu0 0.0
    %68 = vmatprep.subr.mxu0 0.0
    %69 = vmatpush1.msra.mxu0 0.0
    %70 = vmatprep.subr.mxu0 0.0
    %71 = vmatpush1.msra.mxu0 0.0
    %72 = vmatprep.subr.mxu0 0.0
    %73 = vmatpush1.msra.mxu0 0.0
    %74 = vmatprep.subr.mxu0 0.0
    %75 = vmatpush1.msra.mxu0 0.0
    %76 = vmatprep.subr.mxu0 0.0
    %77 = vmatpush1.msra.mxu0 0.0
    %78 = vmatprep.subr.mxu0 0.0
    %79 = vmatpush1.msra.mxu0 0.0
    %80 = vmatprep.subr.mxu0 0.0
    %81 = vmatpush1.msra.mxu0 0.0
    %82 = vmatprep.subr.mxu0 0.0
    %83 = vmatpush1.msra.mxu0 0.0
    %84 = vmatprep.subr.mxu0 0.0
    %85 = vmatpush1.msra.mxu0 0.0
    %86 = vmatprep.subr.mxu0 0.0
    %87 = vmatpush1.msra.mxu0 0.0
    %88 = vmatprep.subr.mxu0 0.0
    %89 = vmatpush1.msra.mxu0 0.0
    %90 = vmatprep.subr.mxu0 0.0
    %91 = vmatpush1.msra.mxu0 0.0
    %92 = vmatprep.subr.mxu0 0.0
    %93 = vmatpush1.msra.mxu0 0.0
    %94 = vmatprep.subr.mxu0 0.0
    %95 = vmatpush1.msra.mxu0 0.0
    %96 = vmatprep.subr.mxu0 0.0
    %97 = vmatpush1.msra.mxu0 0.0
    %98 = vmatprep.mubr.f32.mxu0 0.0
    %99 = vmatmul.mubr.f32.gmra.mrb[0].mxu0 %v32
    %v100 = vpop.f32.mrb[0].mxu0
    %v101 = vadd.f32 0.0, %v100
    %v102 = vpop.f32.mrb[0].mxu0
    %103 = vdwg.mxu0
    %v104 = vand.u32 2147483647, %v21
    %v105 = vsel %vm30, %v104, 0.0
    %106 = vadd.xlane.f32.xlu0 %v105
    %v107 = vpop.xlane.xlu0 %106
    %v108 = vrcp.pop 64.0
    %v109 = vmul.f32 %v107, %v108
    %v110 = vmax.f32 %v109, 1e-05
    %v111 = vrcp.pop %v110
    %v112 = vmul.f32 %v101, %v111
    %v113 = vld [vmem:[%s2] sm:$0xff]
    %v114 = vadd.f32 %v112, %v113
    %v115 = vmax.f32 %v114, 0.0
    %v116 = vld [vmem:[%s3] sm:$0xff]
    %v117 = vld [vmem:[%s3 + $0x8] sm:$0xff]
    %v118 = vld [vmem:[%s3 + $0x10] sm:$0xff]
    %v119 = vld [vmem:[%s3 + $0x18] sm:$0xff]
    %v120 = vld [vmem:[%s4] sm:$0xff]
    %vm121 = vcmask 261120
    %v123 = vsel %vm121, %v115, 0
    %125 = vmatprep.subr.mxu0 0.0
    %126 = vmatpush1.msra.mxu0 %v116
    %127 = vmatprep.subr.mxu0 0.0
    %128 = vmatpush1.msra.mxu0 %v117
    %129 = vmatprep.subr.mxu0 0.0
    %130 = vmatpush1.msra.mxu0 %v118
    %131 = vmatprep.subr.mxu0 0.0
    %132 = vmatpush1.msra.mxu0 %v119
    %133 = vmatprep.subr.mxu0 0.0
    %134 = vmatpush1.msra.mxu0 0.0
    %135 = vmatprep.subr.mxu0 0.0
    %136 = vmatpush1.msra.mxu0 0.0
    %137 = vmatprep.subr.mxu0 0.0
    %138 = vmatpush1.msra.mxu0 0.0
    %139 = vmatprep.subr.mxu0 0.0
    %140 = vmatpush1.msra.mxu0 0.0
    %141 = vmatprep.subr.mxu0 0.0
    %142 = vmatpush1.msra.mxu0 0.0
    %143 = vmatprep.subr.mxu0 0.0
    %144 = vmatpush1.msra.mxu0 0.0
    %145 = vmatprep.subr.mxu0 0.0
    %146 = vmatpush1.msra.mxu0 0.0
    %147 = vmatprep.subr.mxu0 0.0
    %148 = vmatpush1.msra.mxu0 0.0
    %149 = vmatprep.subr.mxu0 0.0
    %150 = vmatpush1.msra.mxu0 0.0
    %151 = vmatprep.subr.mxu0 0.0
    %152 = vmatpush1.msra.mxu0 0.0
    %153 = vmatprep.subr.mxu0 0.0
    %154 = vmatpush1.msra.mxu0 0.0
    %155 = vmatprep.subr.mxu0 0.0
    %156 = vmatpush1.msra.mxu0 0.0
    %157 = vmatprep.subr.mxu0 0.0
    %158 = vmatpush1.msra.mxu0 0.0
    %159 = vmatprep.subr.mxu0 0.0
    %160 = vmatpush1.msra.mxu0 0.0
    %161 = vmatprep.subr.mxu0 0.0
    %162 = vmatpush1.msra.mxu0 0.0
    %163 = vmatprep.subr.mxu0 0.0
    %164 = vmatpush1.msra.mxu0 0.0
    %165 = vmatprep.subr.mxu0 0.0
    %166 = vmatpush1.msra.mxu0 0.0
    %167 = vmatprep.subr.mxu0 0.0
    %168 = vmatpush1.msra.mxu0 0.0
    %169 = vmatprep.subr.mxu0 0.0
    %170 = vmatpush1.msra.mxu0 0.0
    %171 = vmatprep.subr.mxu0 0.0
    %172 = vmatpush1.msra.mxu0 0.0
    %173 = vmatprep.subr.mxu0 0.0
    %174 = vmatpush1.msra.mxu0 0.0
    %175 = vmatprep.subr.mxu0 0.0
    %176 = vmatpush1.msra.mxu0 0.0
    %177 = vmatprep.subr.mxu0 0.0
    %178 = vmatpush1.msra.mxu0 0.0
    %179 = vmatprep.subr.mxu0 0.0
    %180 = vmatpush1.msra.mxu0 0.0
    %181 = vmatprep.subr.mxu0 0.0
    %182 = vmatpush1.msra.mxu0 0.0
    %183 = vmatprep.subr.mxu0 0.0
    %184 = vmatpush1.msra.mxu0 0.0
    %185 = vmatprep.subr.mxu0 0.0
    %186 = vmatpush1.msra.mxu0 0.0
    %187 = vmatprep.subr.mxu0 0.0
    %188 = vmatpush1.msra.mxu0 0.0
    %189 = vmatprep.mubr.f32.mxu0 0.0
    %190 = vmatmul.mubr.f32.gmra.mrb[0].mxu0 %v123
    %v191 = vpop.f32.mrb[0].mxu0
    %v192 = vadd.f32 %v120, %v191
    %v193 = vpop.f32.mrb[0].mxu0
    %194 = vdwg.mxu0
    %v195 = vmax.f32 %v192, 0.0
    %vm196 = vcmp.ne.f32.partialorder %v192, %v192
    %v197 = vadd.f32 %v192, 0.0
    %v198 = vand.u32 2147483647, %v192
    %v199 = vsub.f32 0.0, %v198
    %v200 = vmul.f32 %v199, 1.442695
    %v201 = vpow.pop %v200
    %v202 = vadd.f32 %v201, 1.0
    %v203 = vlog2.pop %v202
    %v204 = vmul.f32 %v203, 0.6931472
    %v205 = vmul.f32 -0.5, %v201
    %v206 = vadd.f32 %v205, 1.0
    %v207 = vmul.f32 %v206, %v201
    %v208 = vand.u32 2147483647, %v201
    %vm209 = vcmp.lt.f32.partialorder %v208, 0.0004427343
    %v210 = vsel %vm209, %v207, %v204
    %v211 = vadd.f32 %v195, %v210
    %v212 = vsel %vm196, %v197, %v211
    %v213 = vlaneseq
    %v214 = vand.u32 %v213, 127
    %vm215 = vcmp.lt.s32.totalorder %v214, 8
    %v216 = vadd.f32 %v212, 2.0
    %vm217 = vcmp.lt.s32.totalorder %v214, 16
    %vm218 = vcmp.lt.s32.totalorder %v214, 24
    %vm219 = vcmp.eq.s32.totalorder %v214, 24
    %v220 = vsel %vm219, %v110, 0.0
    %v221 = vsel %vm218, %v212, %v220
    %v222 = vsel %vm217, %v192, %v221
    %v223 = vsel %vm215, %v216, %v222
    %224 = vst [vmem:[#allocation2] sm:$0xff] %v223
    // Predicated region
    $region22: #{tpu_custom_call.1} parent=1 // pred_check
      _
    $region23: #{tpu_custom_call.1} parent=1 // pred_check_branch
      %226 = sbr.rel (0) target = $region25
    $region24: #{tpu_custom_call.1} parent=1 // pred_region
      %s228 = ssub.s32 128, 128
      %229 = vsyncadd [#allocation3], %s228
      %s231 = sshll.u32 [#allocation2], 4
      %s232 = int_to_ptr.vmem [resolvable:$true] %s231
      %234 = dma.vmem_to_hbm [thread:$0]  %s232, 128, %s5, [#allocation3]
    $region25: #{tpu_custom_call.1} parent=1 // pred_fallthru
      _
    // Predicated region
    $region26: #{tpu_custom_call.1} parent=1 // pred_check
      _
    $region27: #{tpu_custom_call.1} parent=1 // pred_check_branch
      %236 = sbr.rel (0) target = $region29
    $region28: #{tpu_custom_call.1} parent=1 // pred_region
      %237 = dma.done [#allocation3], 128
    $region29: #{tpu_custom_call.1} parent=1 // pred_fallthru
      _
    %238 = vsyncpa [#allocation3], 1

</llo_original>
